<compile_context>
chip_gen: v7x
topology: tpu7x:2x2x1
jax: 0.10.0
libtpu: 0.0.40
codegen_flags: <defaults>
</compile_context>

<pallas_src>
import functools

import jax
import jax.numpy as jnp
from jax.experimental import pallas as pl
from jax.experimental.pallas import tpu as pltpu

_LANE = 128


@functools.lru_cache(maxsize=None)
def _tensorcores_per_chip() -> int:
    """Best-effort TensorCore-per-chip count: 2 on v7x, 1 on v5e/v6e."""
    try:
        kind = jax.devices()[0].device_kind.lower()
    except Exception:  # pragma: no cover - defensive; default to single TC
        kind = ""
    return 2 if "v7" in kind else 1


def _mse_partial_kernel(p_ref, t_ref, o_ref, *, rows, blocks_per_chunk, needs_mask):
    """Accumulate per-(sublane, lane) partial sums of (p - t)^2 for one chunk."""
    c = pl.program_id(0)          # parallel chunk (v7x: one per TensorCore)
    i = pl.program_id(1)          # reduction step within the chunk

    @pl.when(i == 0)
    def _init():
        o_ref[...] = jnp.zeros_like(o_ref)

    br, lane = p_ref.shape
    d = p_ref[...].astype(jnp.float32) - t_ref[...].astype(jnp.float32)
    d2 = d * d

    def fold(x):
        # (br, lane) -> (1, 8, lane) partial sums: pure VPU adds in the hot
        # loop, no per-step cross-lane (XLU) reduction.
        return x.reshape(br // 8, 8, lane).sum(axis=0).reshape(o_ref.shape)

    if not needs_mask:
        # Every block is full and unique: pure sub/mul/add hot path.
        o_ref[...] += fold(d2)
    else:
        base = (c * blocks_per_chunk + i) * br   # scalar global row offset

        # Fast path: block fully inside the array -> unmasked accumulate.
        @pl.when(base + br <= rows)
        def _full():
            o_ref[...] += fold(d2)

        # Slow path: only the single ragged end block builds the iota mask.
        # The where-select (not multiply) neutralizes any garbage/NaN rows
        # read from the padded partial block.  Fully out-of-range clamped
        # duplicate steps (base >= rows) skip the accumulate entirely.
        @pl.when(jnp.logical_and(base < rows, base + br > rows))
        def _ragged():
            row_ids = base + jax.lax.broadcasted_iota(jnp.int32, (br, lane), 0)
            o_ref[...] += fold(jnp.where(row_ids < rows, d2, 0.0))


def custom_loss(preds, target, *, block_rows=None):
    """MSE loss == torch.mean(torch.square(preds - target)); returns a scalar f32."""
    assert preds.shape == target.shape, "preds/target must have identical shapes"
    n = preds.size
    if n == 0:
        return jnp.float32(jnp.nan)          # torch.mean of an empty tensor -> nan

    lane = _LANE
    p_flat = preds.reshape(-1)
    t_flat = target.reshape(-1)

    rows = n // lane
    rem = n - rows * lane

    # Sub-lane tail (< 128 elements): tiny XLA reduction, avoids padding the
    # whole array in HBM.
    if rem:
        dt = p_flat[n - rem:].astype(jnp.float32) - t_flat[n - rem:].astype(jnp.float32)
        tail_sum = jnp.sum(dt * dt)
    else:
        tail_sum = jnp.float32(0.0)

    if rows == 0:
        return tail_sum / n

    p2 = p_flat[: rows * lane].reshape(rows, lane)
    t2 = t_flat[: rows * lane].reshape(rows, lane)

    itemsize = max(jnp.dtype(preds.dtype).itemsize, jnp.dtype(target.dtype).itemsize)
    if block_rows is None:
        # ~4 MiB (f32) / ~2 MiB (bf16) input tiles: amortizes the ~0.35 us
        # per-grid-step overhead on v7x's fast HBM; mild win on v5e/v6e.
        block_rows = 8192

    round8 = lambda x: -(-x // 8) * 8
    block_rows = min(round8(block_rows), round8(rows))

    num_blocks = -(-rows // block_rows)
    # One chunk per TensorCore (leading "parallel" grid axis): 2 on v7x,
    # 1 on single-TC v5e/v6e (avoids the redundant duplicate-block re-read).
    num_chunks = min(_tensorcores_per_chip(), num_blocks)
    bpc = -(-num_blocks // num_chunks)         # blocks per chunk
    needs_mask = (rows % block_rows != 0) or (num_chunks * bpc != num_blocks)

    def in_map(c, i):
        # Clamp so a chunk's trailing "extra" steps re-read the last valid
        # block; their contribution is skipped inside the kernel.
        return (jnp.minimum(c * bpc + i, num_blocks - 1), 0)

    kernel = functools.partial(
        _mse_partial_kernel, rows=rows, blocks_per_chunk=bpc, needs_mask=needs_mask)

    # Explicit VMEM budget: 2 inputs x 2 pipeline buffers of the native-dtype
    # tile, plus headroom for the f32 intermediates of the fold.  Above v5e's
    # 16 MiB default scoped limit, below v7x's 64 MiB physical per-TC VMEM.
    tile_bytes = block_rows * lane * itemsize
    f32_tile_bytes = block_rows * lane * 4
    vmem_limit = 2 * 2 * tile_bytes + 4 * f32_tile_bytes + (2 << 20)
    vmem_limit = int(min(max(vmem_limit, 32 << 20), 56 << 20))

    partials = pl.pallas_call(
        kernel,
        out_shape=jax.ShapeDtypeStruct((num_chunks, 8, lane), jnp.float32),
        grid_spec=pltpu.PrefetchScalarGridSpec(
            num_scalar_prefetch=0,
            grid=(num_chunks, bpc),
            in_specs=[
                pl.BlockSpec((block_rows, lane), in_map),
                pl.BlockSpec((block_rows, lane), in_map),
            ],
            # Output block index constant across the reduction axis i -> the
            # (1, 8, 128) tile stays VMEM-resident and acts as the accumulator.
            out_specs=pl.BlockSpec((1, 8, lane), lambda c, i: (c, 0, 0)),
        ),
        compiler_params=pltpu.CompilerParams(
            dimension_semantics=("parallel", "arbitrary"),
            vmem_limit_bytes=vmem_limit,
        ),
    )(p2, t2)

    return (jnp.sum(partials) + tail_sum) / n


if __name__ == "__main__":
    key = jax.random.PRNGKey(0)
    k1, k2, k3, k4, k5, k6 = jax.random.split(key, 6)

    loss_fn = jax.jit(custom_loss)

    # Typical NUMBER-feature loss inputs: one scalar prediction per example.
    preds_a = jax.random.normal(k1, (300, 1), dtype=jnp.float32)
    target_a = jax.random.normal(k2, (300, 1), dtype=jnp.float32)
    loss_a = loss_fn(preds_a, target_a)
    jax.block_until_ready(loss_a)
    ref_a = jnp.mean(jnp.square(preds_a - target_a))
    assert jnp.allclose(loss_a, ref_a, rtol=1e-4, atol=1e-6), (loss_a, ref_a)

    # Larger 1-D case exercising multi-block accumulation, the (possible)
    # 2-way v7x chunk split with duplicate-block skip, the ragged last block,
    # and the <128-element tail.
    preds_b = jax.random.normal(k3, (2_100_003,), dtype=jnp.float32)
    target_b = jax.random.normal(k4, (2_100_003,), dtype=jnp.float32)
    loss_b = loss_fn(preds_b, target_b)
    jax.block_until_ready(loss_b)
    ref_b = jnp.mean(jnp.square(preds_b - target_b))
    assert jnp.allclose(loss_b, ref_b, rtol=5e-4, atol=1e-6), (loss_b, ref_b)

    # bf16 inputs exercise the native-dtype streaming + f32 accumulate path.
    preds_c = jax.random.normal(k5, (1024, 3), dtype=jnp.bfloat16)
    target_c = jax.random.normal(k6, (1024, 3), dtype=jnp.bfloat16)
    loss_c = loss_fn(preds_c, target_c)
    jax.block_until_ready(loss_c)
    ref_c = jnp.mean(jnp.square(preds_c.astype(jnp.float32)
                                - target_c.astype(jnp.float32)))
    assert jnp.allclose(loss_c, ref_c, rtol=1e-3, atol=1e-5), (loss_c, ref_c)

    print("KERNEL_OK")
</pallas_src>

<mosaic_0001>
module attributes {stable_mosaic.version = 11 : i64} {
  func.func @_mse_partial_kernel(%arg0: i32, %arg1: i32, %arg2: memref<8x128xf32, #tpu.memory_space<vmem>>, %arg3: memref<8x128xf32, #tpu.memory_space<vmem>>, %arg4: memref<1x8x128xf32, #tpu.memory_space<vmem>>) attributes {dimension_semantics = [#tpu.dimension_semantics<parallel>, #tpu.dimension_semantics<arbitrary>], iteration_bounds = array<i64: 1, 1>, scalar_prefetch = 0 : i64, scratch_operands = 0 : i64, tpu.core_type = #tpu.core_type<tc>, window_params = [{transform_indices = @transform_0, window_bounds = array<i64: 8, 128>}, {transform_indices = @transform_1, window_bounds = array<i64: 8, 128>}, {transform_indices = @transform_2, window_bounds = array<i64: 1, 8, 128>}]} {
    %c0_i32 = arith.constant 0 : i32
    %0 = arith.cmpi eq, %arg1, %c0_i32 : i32
    %1 = arith.extui %0 : i1 to i32
    %c0_i32_0 = arith.constant 0 : i32
    %2 = arith.cmpi ne, %1, %c0_i32_0 : i32
    scf.if %2 {
      %cst = arith.constant 0.000000e+00 : f32
      %20 = vector.broadcast %cst : f32 to vector<1x8x128xf32>
      %c0_10 = arith.constant 0 : index
      %c0_11 = arith.constant 0 : index
      %c0_12 = arith.constant 0 : index
      %21 = vector.load %arg4[%c0_10, %c0_11, %c0_12] : memref<1x8x128xf32, #tpu.memory_space<vmem>>, vector<1x8x128xf32>
      tpu.vector_store %arg4[%c0_10, %c0_11, %c0_12], %20 {strides = array<i32>} : memref<1x8x128xf32, #tpu.memory_space<vmem>>, vector<1x8x128xf32>,
    } else {
    }
    %c0 = arith.constant 0 : index
    %c0_1 = arith.constant 0 : index
    %3 = vector.load %arg2[%c0, %c0_1] : memref<8x128xf32, #tpu.memory_space<vmem>>, vector<8x128xf32>
    %c0_2 = arith.constant 0 : index
    %c0_3 = arith.constant 0 : index
    %4 = vector.load %arg3[%c0_2, %c0_3] : memref<8x128xf32, #tpu.memory_space<vmem>>, vector<8x128xf32>
    %5 = arith.subf %3, %4 : vector<8x128xf32>
    %6 = arith.mulf %5, %5 : vector<8x128xf32>
    %c1_i32 = arith.constant 1 : i32
    %7 = arith.muli %arg0, %c1_i32 : i32
    %8 = arith.addi %7, %arg1 : i32
    %c8_i32 = arith.constant 8 : i32
    %9 = arith.muli %8, %c8_i32 : i32
    %c8_i32_4 = arith.constant 8 : i32
    %10 = arith.addi %9, %c8_i32_4 : i32
    %c2_i32 = arith.constant 2 : i32
    %11 = arith.cmpi sle, %10, %c2_i32 : i32
    %12 = arith.extui %11 : i1 to i32
    %c0_i32_5 = arith.constant 0 : i32
    %13 = arith.cmpi ne, %12, %c0_i32_5 : i32
    scf.if %13 {
      %c0_10 = arith.constant 0 : index
      %c0_11 = arith.constant 0 : index
      %c0_12 = arith.constant 0 : index
      %20 = vector.load %arg4[%c0_10, %c0_11, %c0_12] : memref<1x8x128xf32, #tpu.memory_space<vmem>>, vector<1x8x128xf32>
      %21 = vector.shape_cast %6 : vector<8x128xf32> to vector<1x8x128xf32>
      %cst = arith.constant dense<0.000000e+00> : vector<8x128xf32>
      %22 = vector.multi_reduction <add>, %21, %cst [0] : vector<1x8x128xf32> to vector<8x128xf32>
      %23 = vector.shape_cast %22 : vector<8x128xf32> to vector<1x8x128xf32>
      %24 = arith.addf %20, %23 : vector<1x8x128xf32>
      %c0_13 = arith.constant 0 : index
      %c0_14 = arith.constant 0 : index
      %c0_15 = arith.constant 0 : index
      %25 = vector.load %arg4[%c0_13, %c0_14, %c0_15] : memref<1x8x128xf32, #tpu.memory_space<vmem>>, vector<1x8x128xf32>
      tpu.vector_store %arg4[%c0_13, %c0_14, %c0_15], %24 {strides = array<i32>} : memref<1x8x128xf32, #tpu.memory_space<vmem>>, vector<1x8x128xf32>,
    } else {
    }
    %c2_i32_6 = arith.constant 2 : i32
    %14 = arith.cmpi slt, %9, %c2_i32_6 : i32
    %c8_i32_7 = arith.constant 8 : i32
    %15 = arith.addi %9, %c8_i32_7 : i32
    %c2_i32_8 = arith.constant 2 : i32
    %16 = arith.cmpi sgt, %15, %c2_i32_8 : i32
    %17 = arith.andi %14, %16 : i1
    %18 = arith.extui %17 : i1 to i32
    %c0_i32_9 = arith.constant 0 : i32
    %19 = arith.cmpi ne, %18, %c0_i32_9 : i32
    scf.if %19 {
      %20 = tpu.iota {dimensions = array<i32: 0>} : vector<8x128xi32>
      %21 = vector.broadcast %9 : i32 to vector<8x128xi32>
      %22 = arith.addi %21, %20 : vector<8x128xi32>
      %c0_10 = arith.constant 0 : index
      %c0_11 = arith.constant 0 : index
      %c0_12 = arith.constant 0 : index
      %23 = vector.load %arg4[%c0_10, %c0_11, %c0_12] : memref<1x8x128xf32, #tpu.memory_space<vmem>>, vector<1x8x128xf32>
      %c2_i32_13 = arith.constant 2 : i32
      %24 = vector.broadcast %c2_i32_13 : i32 to vector<8x128xi32>
      %25 = arith.cmpi slt, %22, %24 : vector<8x128xi32>
      %cst = arith.constant 0.000000e+00 : f32
      %26 = vector.broadcast %cst : f32 to vector<8x128xf32>
      %27 = arith.select %25, %6, %26 : vector<8x128xi1>, vector<8x128xf32>
      %28 = vector.shape_cast %27 : vector<8x128xf32> to vector<1x8x128xf32>
      %cst_14 = arith.constant dense<0.000000e+00> : vector<8x128xf32>
      %29 = vector.multi_reduction <add>, %28, %cst_14 [0] : vector<1x8x128xf32> to vector<8x128xf32>
      %30 = vector.shape_cast %29 : vector<8x128xf32> to vector<1x8x128xf32>
      %31 = arith.addf %23, %30 : vector<1x8x128xf32>
      %c0_15 = arith.constant 0 : index
      %c0_16 = arith.constant 0 : index
      %c0_17 = arith.constant 0 : index
      %32 = vector.load %arg4[%c0_15, %c0_16, %c0_17] : memref<1x8x128xf32, #tpu.memory_space<vmem>>, vector<1x8x128xf32>
      tpu.vector_store %arg4[%c0_15, %c0_16, %c0_17], %31 {strides = array<i32>} : memref<1x8x128xf32, #tpu.memory_space<vmem>>, vector<1x8x128xf32>,
    } else {
    }
    return
  }
  func.func @transform_0(%arg0: i32, %arg1: i32) -> (i32, i32) {
    %c1_i32 = arith.constant 1 : i32
    %0 = arith.muli %arg0, %c1_i32 : i32
    %1 = arith.addi %0, %arg1 : i32
    %c0_i32 = arith.constant 0 : i32
    %2 = arith.minsi %1, %c0_i32 : i32
    %c0_i32_0 = arith.constant 0 : i32
    %c0_i32_1 = arith.constant 0 : i32
    return %2, %c0_i32_0 : i32, i32
  }
  func.func @transform_1(%arg0: i32, %arg1: i32) -> (i32, i32) {
    %c1_i32 = arith.constant 1 : i32
    %0 = arith.muli %arg0, %c1_i32 : i32
    %1 = arith.addi %0, %arg1 : i32
    %c0_i32 = arith.constant 0 : i32
    %2 = arith.minsi %1, %c0_i32 : i32
    %c0_i32_0 = arith.constant 0 : i32
    %c0_i32_1 = arith.constant 0 : i32
    return %2, %c0_i32_0 : i32, i32
  }
  func.func @transform_2(%arg0: i32, %arg1: i32) -> (i32, i32, i32) {
    %c0_i32 = arith.constant 0 : i32
    %c0_i32_0 = arith.constant 0 : i32
    %c0_i32_1 = arith.constant 0 : i32
    return %arg0, %c0_i32, %c0_i32_0 : i32, i32, i32
  }
}

</mosaic_0001>

<llo_original>
// kernel: custom_loss.1
$region0: #{custom_loss.1}
  #allocation0 [shape = 'u32[]', space=smem, size = 0x4, offset = 0x4, fixed_abs, tag = 'smem constant byte address 0x4 - core index']
  #allocation1 [shape = 'u32[144,128]{1,0:T(1,128)}', space=vmem, size = 0x12000, scoped, tag = 'internal scratch']
  %s0 = inlined_call_operand.vmem [shape: f32[2,128], index: 0, kind: input, shape index: {}]
  %s1 = inlined_call_operand.vmem [shape: f32[2,128], index: 1, kind: input, shape index: {}]
  %s2 = inlined_call_operand.vmem [shape: f32[1,8,128], index: 2, kind: output, shape index: {}]
  %s3 = sld [smem:[#allocation0]]
  $region30: #{custom_loss.1} parent=0
    _
  %s5 = ssub.s32 1, %s3
  %s6 = scalar_select 0, %s5, %s3
  // Predicated region
  $region2: #{custom_loss.1} parent=0 // pred_check
    _
  $region3: #{custom_loss.1} parent=0 // pred_check_branch
    %8 = sbr.rel (0) target = $region5
  $region4: #{custom_loss.1} parent=0 // pred_region
    %s9 = sadd.s32 0, 0
    %p10 = scmp.lt.s32.totalorder %s9, 0
    %s11 = scalar_select %p10, %s9, 0
    %s12 = smul.u32 4, %s11
    %s13 = ssub.s32 1, %s12
    %s14 = smul.u32 32, %s13
    %p15 = scmp.lt.s32.totalorder %s12, 0
    %s16 = scalar_select %p15, %s12, 0
    %s17 = smul.addr %s16, 2
    %s18 = scalar_lea.vmem %s0, %s17
    %s19 = sadd.s32 0, 0
    %p20 = scmp.lt.s32.totalorder %s19, 0
    %s21 = scalar_select %p20, %s19, 0
    %s22 = smul.u32 4, %s21
    %s23 = ssub.s32 1, %s22
    %s24 = smul.u32 32, %s23
  $region5: #{custom_loss.1} parent=0 // pred_fallthru
    _
  // Predicated region
  $region6: #{custom_loss.1} parent=0 // pred_check
    _
  $region7: #{custom_loss.1} parent=0 // pred_check_branch
    %26 = sbr.rel (0) target = $region9
  $region8: #{custom_loss.1} parent=0 // pred_region
    %s27 = sadd.s32 0, 0
    %p28 = scmp.lt.s32.totalorder %s27, 0
    %s29 = scalar_select %p28, %s27, 0
    %s30 = smul.u32 4, %s29
    %s31 = ssub.s32 1, %s30
    %s32 = smul.u32 32, %s31
    %p33 = scmp.lt.s32.totalorder %s30, 0
    %s34 = scalar_select %p33, %s30, 0
    %s35 = smul.addr %s34, 2
    %s36 = scalar_lea.vmem %s1, %s35
    %s37 = sadd.s32 0, 0
    %p38 = scmp.lt.s32.totalorder %s37, 0
    %s39 = scalar_select %p38, %s37, 0
    %s40 = smul.u32 4, %s39
    %s41 = ssub.s32 1, %s40
    %s42 = smul.u32 32, %s41
  $region9: #{custom_loss.1} parent=0 // pred_fallthru
    _
  %s43 = sadd.s32 0, 0
  %p44 = scmp.lt.s32.totalorder %s43, 0
  %s45 = scalar_select %p44, %s43, 0
  %s46 = smul.u32 4, %s45
  %s47 = ssub.s32 1, %s46
  %s48 = smul.u32 32, %s47
  %p49 = scmp.lt.s32.totalorder %s46, 0
  %s50 = scalar_select %p49, %s46, 0
  %s51 = smul.addr %s50, 2
  %s52 = scalar_lea.vmem %s0, %s51
  %s53 = sadd.s32 0, 0
  %p54 = scmp.lt.s32.totalorder %s53, 0
  %s55 = scalar_select %p54, %s53, 0
  %s56 = smul.u32 4, %s55
  %s57 = ssub.s32 1, %s56
  %s58 = smul.u32 32, %s57
  %p59 = scmp.lt.s32.totalorder %s56, 0
  %s60 = scalar_select %p59, %s56, 0
  %s61 = smul.addr %s60, 2
  %s62 = scalar_lea.vmem %s1, %s61
  %s63 = sadd.s32 0, 0
  %p64 = scmp.lt.s32.totalorder %s63, 0
  %s65 = scalar_select %p64, %s63, 0
  %s66 = smul.u32 4, %s65
  %s67 = ssub.s32 1, %s66
  %s68 = smul.u32 32, %s67
  %p69 = scmp.lt.s32.totalorder %s66, 0
  %s70 = scalar_select %p69, %s66, 0
  %s71 = smul.addr %s70, 2
  %s72 = scalar_lea.vmem %s0, %s71
  %s73 = sadd.s32 0, 0
  %p74 = scmp.lt.s32.totalorder %s73, 0
  %s75 = scalar_select %p74, %s73, 0
  %s76 = smul.u32 4, %s75
  %s77 = ssub.s32 1, %s76
  %s78 = smul.u32 32, %s77
  %s79 = sadd.s32 0, 0
  %p80 = scmp.lt.s32.totalorder %s79, 0
  %s81 = scalar_select %p80, %s79, 0
  %s82 = smul.u32 4, %s81
  %s83 = ssub.s32 1, %s82
  %s84 = smul.u32 32, %s83
  %p85 = scmp.lt.s32.totalorder %s82, 0
  %s86 = scalar_select %p85, %s82, 0
  %s87 = smul.addr %s86, 2
  %s88 = scalar_lea.vmem %s1, %s87
  %s89 = sadd.s32 0, 0
  %p90 = scmp.lt.s32.totalorder %s89, 0
  %s91 = scalar_select %p90, %s89, 0
  %s92 = smul.u32 4, %s91
  %s93 = ssub.s32 1, %s92
  %s94 = smul.u32 32, %s93
  %p95 = scmp.eq.s32.totalorder 0, 0
  // Predicated region
  $region10: #{custom_loss.1} parent=0 // pred_check
    %p96 = pneg %p95
  $region11: #{custom_loss.1} parent=0 // pred_check_branch
    %98 = sbr.rel (%p96) target = $region13
  $region12: #{custom_loss.1} parent=0 // pred_region
    %99 = vst [vmem:[%s2] sm:$0xff] 0.0
  $region13: #{custom_loss.1} parent=0 // pred_fallthru
    _
  %v100 = vld [vmem:[%s72] sm:$0xff]
  %v101 = vld [vmem:[%s88] sm:$0xff]
  %v102 = vsub.f32 %v100, %v101
  %v103 = vmul.f32 %v102, %v102
  %s104 = sadd.s32 0, 0
  %s105 = smul.u32 %s104, 8
  %s106 = sadd.s32 %s105, 8
  %p107 = scmp.le.s32.totalorder %s106, 2
  // Predicated region
  $region14: #{custom_loss.1} parent=0 // pred_check
    %p108 = pneg %p107
  $region15: #{custom_loss.1} parent=0 // pred_check_branch
    %110 = sbr.rel (%p108) target = $region17
  $region16: #{custom_loss.1} parent=0 // pred_region
    %v111 = vld [vmem:[%s2] sm:$0xff]
    %v112 = vadd.f32 %v103, 0.0
    %v113 = vadd.f32 %v111, %v112
    %114 = vst [vmem:[%s2] sm:$0xff] %v113
  $region17: #{custom_loss.1} parent=0 // pred_fallthru
    _
  %p115 = scmp.lt.s32.totalorder %s105, 2
  %p116 = scmp.gt.s32.totalorder %s106, 2
  %p117 = pnand %p115, %p116
  %p118 = pneg %p117
  // Predicated region
  $region18: #{custom_loss.1} parent=0 // pred_check
    _
  $region19: #{custom_loss.1} parent=0 // pred_check_branch
    %120 = sbr.rel (%p117) target = $region21
  $region20: #{custom_loss.1} parent=0 // pred_region
    %v121 = vlaneseq
    %v122 = vshrl.u32 %v121, 7
    %v123 = vstv %s105
    %v124 = vadd.s32 %v123, %v122
    %v125 = vld [vmem:[%s2] sm:$0xff]
    %vm126 = vcmp.lt.s32.totalorder %v124, 2
    %v127 = vsel %vm126, %v103, 0.0
    %v128 = vadd.f32 %v127, 0.0
    %v129 = vadd.f32 %v125, %v128
    %130 = vst [vmem:[%s2] sm:$0xff] %v129
  $region21: #{custom_loss.1} parent=0 // pred_fallthru
    _
  // Predicated region
  $region22: #{custom_loss.1} parent=0 // pred_check
    _
  $region23: #{custom_loss.1} parent=0 // pred_check_branch
    %132 = sbr.rel (0) target = $region25
  $region24: #{custom_loss.1} parent=0 // pred_region
    _
  $region25: #{custom_loss.1} parent=0 // pred_fallthru
    _
  // Predicated region
  $region26: #{custom_loss.1} parent=0 // pred_check
    _
  $region27: #{custom_loss.1} parent=0 // pred_check_branch
    %134 = sbr.rel (0) target = $region29
  $region28: #{custom_loss.1} parent=0 // pred_region
    _
  $region29: #{custom_loss.1} parent=0 // pred_fallthru
    _

</llo_original>
